<compile_context>
chip_gen: v5e
topology: v5e:2x2
jax: 0.10.0
libtpu: 0.0.40
codegen_flags: <defaults>
</compile_context>

<pallas_src>
import functools

import jax
import jax.numpy as jnp
from jax.experimental import pallas as pl
from jax.experimental.pallas import tpu as pltpu

_TOKEN_ALIGN = 16  # sublane-safe token-tile quantum (bf16 packs 16 rows / vreg)
_LANE = 128


def _round_up(a: int, b: int) -> int:
    return (a + b - 1) // b * b


# ----------------------------------------------------------------------------
# Kernels
# ----------------------------------------------------------------------------
def ffn_kernel(x_ref, w1_ref, b1_ref, w2_ref, b2_ref, o_ref):
    # Single-pass variant (whole F resident).
    # x_ref:(tm,Hp)  w1:(Hp,Fp)  b1:(1,Fp) f32  w2:(Fp,Hp)  b2:(1,Hp) f32  o:(tm,Hp)
    x = x_ref[...]
    h = jnp.dot(x, w1_ref[...], preferred_element_type=jnp.float32)   # MXU, f32 acc
    h = jnp.maximum(h + b1_ref[...], 0.0)                             # bias+ReLU in f32 (VPU)
    y = jnp.dot(h.astype(w2_ref.dtype), w2_ref[...],
                preferred_element_type=jnp.float32)
    o_ref[...] = (y + b2_ref[...]).astype(o_ref.dtype)


def ffn_kernel_fsplit(x_ref, w1_ref, b1_ref, w2_ref, b2_ref, o_ref, acc_ref):
    # F-split variant: grid = (grid_m, grid_f), f is the inner "arbitrary" axis.
    # w1:(Hp,tf)  b1:(1,tf)  w2:(tf,Hp)  acc:(tm,Hp) f32 scratch (persists across f).
    f = pl.program_id(1)

    @pl.when(f == 0)
    def _():
        acc_ref[...] = jnp.zeros_like(acc_ref)

    h = jnp.dot(x_ref[...], w1_ref[...], preferred_element_type=jnp.float32)
    h = jnp.maximum(h + b1_ref[...], 0.0)
    acc_ref[...] += jnp.dot(h.astype(w2_ref.dtype), w2_ref[...],
                            preferred_element_type=jnp.float32)

    @pl.when(f == pl.num_programs(1) - 1)
    def _():
        o_ref[...] = (acc_ref[...] + b2_ref[...]).astype(o_ref.dtype)


# ----------------------------------------------------------------------------
# Tiling / VMEM arithmetic
# ----------------------------------------------------------------------------
def _vmem_capacity_bytes() -> int:
    try:
        return int(pltpu.get_tpu_info().vmem_capacity_bytes)
    except Exception:
        return 64 * 1024 * 1024  # conservative per-TC default (v7x)


def _weight_bytes(Hp, tf, c_item, buffers):
    # w1 (Hp,tf) + w2 (tf,Hp) in compute dtype, b1 (1,tf) f32
    return buffers * (2 * Hp * tf * c_item + tf * 4)


def _vmem_estimate(tm, tf, grid_f, Hp, c_item, o_item):
    wbuf = 1 if grid_f == 1 else 2
    est = 2 * tm * Hp * c_item                   # x tile (double-buffered)
    est += _weight_bytes(Hp, tf, c_item, wbuf)   # w1 + w2 + b1
    est += Hp * 4                                # b2 (f32, resident)
    est += 2 * tm * Hp * o_item                  # out tile (double-buffered)
    est += tm * tf * 4                           # f32 intermediate h
    if grid_f > 1:
        est += tm * Hp * 4                       # f32 accumulator scratch
    return est


def _largest_divisor_tile(total, target, quantum=_LANE):
    """Largest multiple of `quantum` dividing `total` and <= target (>= quantum)."""
    best = quantum
    for d in range(quantum, min(total, max(target, quantum)) + 1, quantum):
        if total % d == 0:
            best = d
    return best


def _choose_tiling(M, Hp, Fp, c_item, o_item, vmem_cap, force_tf=None):
    # Budget with headroom (~70% of physical, never within 8 MiB of the ceiling).
    budget = max(min((vmem_cap * 7) // 10, vmem_cap - (8 << 20)), 8 << 20)
    # Generation-aware token-tile cap: 512 where 128 MiB VMEM allows (v5e/v6e), 256 on v7x.
    tm_cap = 512 if vmem_cap >= (96 << 20) else 256
    if vmem_cap >= (96 << 20) and Hp <= 256:
        tm_cap = 1024  # small lane dims: go bigger, per-grid-step overhead dominates

    # ---- F split: bound the resident weight slabs + (tm, F) intermediate ----
    if force_tf is not None:
        tf = force_tf
    else:
        tf = Fp
        while tf > 512 and _weight_bytes(
                Hp, tf, c_item, 1 if tf == Fp else 2) > budget // 2:
            tf = _largest_divisor_tile(Fp, tf // 2)
    grid_f = pl.cdiv(Fp, tf)

    # ---- token tile: largest that fits, then balance the tail ----
    def est(tm_):
        return _vmem_estimate(tm_, tf, grid_f, Hp, c_item, o_item)

    tm_fit = _TOKEN_ALIGN
    for cand in (1024, 512, 256, 128, 64, 32, 16):
        if cand <= tm_cap and est(cand) <= budget:
            tm_fit = cand
            break

    n_tiles = pl.cdiv(M, tm_fit)
    if n_tiles < 2 and M > 2 * _TOKEN_ALIGN:
        n_tiles = 2  # v7x megacore: both TensorCores get a tile (harmless on 1-TC parts)
    tm = min(tm_fit, _round_up(pl.cdiv(M, n_tiles), _TOKEN_ALIGN))
    grid_m = pl.cdiv(M, tm)

    need = est(tm)
    vmem_limit = max(2 * need, 32 << 20)
    vmem_limit = min(vmem_limit, (vmem_cap * 3) // 4)
    vmem_limit = max(vmem_limit, need + (4 << 20))
    return tm, grid_m, tf, grid_f, int(vmem_limit)


# ----------------------------------------------------------------------------
# Parameter preparation (do this ONCE; cache the result across forward calls)
# ----------------------------------------------------------------------------
def prepare_ffn_params(w1, b1, w2, b2, *, compute_dtype=jnp.bfloat16):
    """Pad lane dims (H, F) to multiples of 128 and cast weights to compute dtype.
    PyTorch stores nn.Linear weight as (out, in); here weights are (in, out) so the
    kernel computes x @ W directly (same math). Biases stay f32 (VPU-side add)."""
    H, F = w1.shape
    Hp, Fp = _round_up(H, _LANE), _round_up(F, _LANE)
    w1p = jnp.pad(jnp.asarray(w1, compute_dtype), ((0, Hp - H), (0, Fp - F)))
    w2p = jnp.pad(jnp.asarray(w2, compute_dtype), ((0, Fp - F), (0, Hp - H)))
    b1p = jnp.pad(jnp.asarray(b1, jnp.float32).reshape(1, F), ((0, 0), (0, Fp - F)))
    b2p = jnp.pad(jnp.asarray(b2, jnp.float32).reshape(1, H), ((0, 0), (0, Hp - H)))
    return w1p, b1p, w2p, b2p


# ----------------------------------------------------------------------------
# Forward
# ----------------------------------------------------------------------------
@functools.partial(jax.jit, static_argnames=("out_dtype", "force_tf"))
def ffn_forward(x, w1p, b1p, w2p, b2p, *, out_dtype=None, force_tf=None):
    """x: [B, S, H] -> [B, S, H]. Weights must come from prepare_ffn_params."""
    B, S, H = x.shape
    Hp, Fp = w1p.shape
    compute_dtype = w1p.dtype
    out_dtype = x.dtype if out_dtype is None else out_dtype
    c_item = jnp.dtype(compute_dtype).itemsize
    o_item = jnp.dtype(out_dtype).itemsize
    M = B * S

    tm, grid_m, tf, grid_f, vmem_limit = _choose_tiling(
        M, Hp, Fp, c_item, o_item, _vmem_capacity_bytes(), force_tf)
    Mp = grid_m * tm

    # Activation prep: cast/pad only when actually needed (skip extra HBM round trips).
    x2d = x.reshape(M, H)
    if x2d.dtype != compute_dtype:
        x2d = x2d.astype(compute_dtype)
    if Mp != M or Hp != H:
        x2d = jnp.pad(x2d, ((0, Mp - M), (0, Hp - H)))

    cost = pl.CostEstimate(
        flops=4 * Mp * Hp * Fp,                      # two (Mp,Hp)x(Hp/Fp) matmuls
        transcendentals=0,
        bytes_accessed=(Mp * Hp * c_item             # x in
                        + 2 * Hp * Fp * c_item       # w1 + w2 (read once, resident)
                        + 4 * (Fp + Hp)              # biases (f32)
                        + Mp * Hp * o_item))         # out

    resident = pl.Buffered(1)  # constant-index operands: single-buffer (VMEM hygiene)

    if grid_f == 1:
        grid_spec = pltpu.PrefetchScalarGridSpec(
            num_scalar_prefetch=0,
            grid=(grid_m,),
            in_specs=[
                pl.BlockSpec((tm, Hp), lambda i: (i, 0)),                         # x tile
                pl.BlockSpec((Hp, Fp), lambda i: (0, 0), pipeline_mode=resident),  # w1
                pl.BlockSpec((1, Fp), lambda i: (0, 0), pipeline_mode=resident),   # b1
                pl.BlockSpec((Fp, Hp), lambda i: (0, 0), pipeline_mode=resident),  # w2
                pl.BlockSpec((1, Hp), lambda i: (0, 0), pipeline_mode=resident),   # b2
            ],
            out_specs=pl.BlockSpec((tm, Hp), lambda i: (i, 0)),                    # lane-dense
        )
        kernel = ffn_kernel
        dims = ("parallel",)
    else:
        # F-split: inner "arbitrary" axis over F with an f32 accumulator scratch.
        grid_spec = pltpu.PrefetchScalarGridSpec(
            num_scalar_prefetch=0,
            grid=(grid_m, grid_f),
            in_specs=[
                pl.BlockSpec((tm, Hp), lambda i, f: (i, 0)),                        # x tile
                pl.BlockSpec((Hp, tf), lambda i, f: (0, f)),                        # w1 slab
                pl.BlockSpec((1, tf), lambda i, f: (0, f)),                         # b1 slab
                pl.BlockSpec((tf, Hp), lambda i, f: (f, 0)),                        # w2 slab
                pl.BlockSpec((1, Hp), lambda i, f: (0, 0), pipeline_mode=resident),  # b2
            ],
            out_specs=pl.BlockSpec((tm, Hp), lambda i, f: (i, 0)),
            scratch_shapes=[pltpu.VMEM((tm, Hp), jnp.float32)],
        )
        kernel = ffn_kernel_fsplit
        dims = ("parallel", "arbitrary")

    out2d = pl.pallas_call(
        kernel,
        out_shape=jax.ShapeDtypeStruct((Mp, Hp), out_dtype),
        grid_spec=grid_spec,
        compiler_params=pltpu.CompilerParams(
            dimension_semantics=dims,
            vmem_limit_bytes=vmem_limit),
        cost_estimate=cost,
    )(x2d, w1p, b1p, w2p, b2p)

    if Mp != M or Hp != H:
        out2d = out2d[:M, :H]
    return out2d.reshape(B, S, H)


def ffn_reference(x, w1, b1, w2, b2):
    B, S, H = x.shape
    h = jnp.maximum(x.reshape(-1, H) @ w1 + b1[None, :], 0.0)
    return (h @ w2 + b2[None, :]).reshape(B, S, H)


def ffn_apply(x, w1, b1, w2, b2, *, compute_dtype=jnp.bfloat16):
    """Dispatcher: tiny H/F (MXU lanes would be >75% zero-padding, launch-overhead
    bound) go straight to XLA; production sizes go through the Pallas kernel."""
    H, F = w1.shape
    if H < 64 and F < 64:
        return ffn_reference(x, w1, b1, w2, b2).astype(x.dtype)
    params = prepare_ffn_params(w1, b1, w2, b2, compute_dtype=compute_dtype)
    return ffn_forward(x, *params)


def init_ffn_params(key, hidden_size, ff_size, dtype=jnp.float32):
    """Deterministic init matching nn.Linear default (uniform +/- 1/sqrt(fan_in)),
    stored transposed (in, out)."""
    k1, k2, k3, k4 = jax.random.split(key, 4)
    bound1 = 1.0 / (hidden_size ** 0.5)
    bound2 = 1.0 / (ff_size ** 0.5)
    w1 = jax.random.uniform(k1, (hidden_size, ff_size), dtype, -bound1, bound1)
    b1 = jax.random.uniform(k2, (ff_size,), dtype, -bound1, bound1)
    w2 = jax.random.uniform(k3, (ff_size, hidden_size), dtype, -bound2, bound2)
    b2 = jax.random.uniform(k4, (hidden_size,), dtype, -bound2, bound2)
    return w1, b1, w2, b2


if __name__ == "__main__":
    # args.hidden_size = 32, args.ff_size = 64, args.dropout_r (identity in eval)
    batch, seq, hidden, ff = 2, 8, 32, 64

    key = jax.random.PRNGKey(0)
    kx, kp = jax.random.split(key)
    x = jax.random.normal(kx, (batch, seq, hidden), jnp.float32)
    w1, b1, w2, b2 = init_ffn_params(kp, hidden, ff)
    ref = ffn_reference(x, w1, b1, w2, b2)

    # f32 MXU-operand path: tight tolerance.
    p32 = prepare_ffn_params(w1, b1, w2, b2, compute_dtype=jnp.float32)
    out_f32 = jax.block_until_ready(ffn_forward(x, *p32))
    assert out_f32.shape == (batch, seq, hidden)
    assert jnp.allclose(out_f32, ref, atol=1e-5, rtol=1e-5)

    # bf16 MXU-operand path (default; what v6e/v7x want): loose tolerance for rounding.
    pbf = prepare_ffn_params(w1, b1, w2, b2)
    out_bf16 = jax.block_until_ready(ffn_forward(x, *pbf))
    assert out_bf16.shape == (batch, seq, hidden)
    assert jnp.allclose(out_bf16, ref, atol=5e-2, rtol=5e-2)

    # Exercise the F-split (accumulator) path and the 2-tile token grid (megacore path).
    hidden2, ff2, seq2 = 128, 512, 40
    x2 = jax.random.normal(kx, (batch, seq2, hidden2), jnp.float32)
    w1b, b1b, w2b, b2b = init_ffn_params(kp, hidden2, ff2)
    ref2 = ffn_reference(x2, w1b, b1b, w2b, b2b)
    p2 = prepare_ffn_params(w1b, b1b, w2b, b2b, compute_dtype=jnp.float32)
    out2 = jax.block_until_ready(ffn_forward(x2, *p2, force_tf=256))
    assert out2.shape == (batch, seq2, hidden2)
    assert jnp.allclose(out2, ref2, atol=1e-4, rtol=1e-4)

    print("KERNEL_OK")
</pallas_src>

<mosaic_0001>
module attributes {stable_mosaic.version = 11 : i64} {
  func.func @ffn_kernel(%arg0: i32, %arg1: memref<16x128xf32, #tpu.memory_space<vmem>>, %arg2: memref<128x128xf32, #tpu.memory_space<vmem>>, %arg3: memref<1x128xf32, #tpu.memory_space<vmem>>, %arg4: memref<128x128xf32, #tpu.memory_space<vmem>>, %arg5: memref<1x128xf32, #tpu.memory_space<vmem>>, %arg6: memref<16x128xf32, #tpu.memory_space<vmem>>) attributes {dimension_semantics = [#tpu.dimension_semantics<parallel>], iteration_bounds = array<i64: 1>, scalar_prefetch = 0 : i64, scratch_operands = 0 : i64, tpu.core_type = #tpu.core_type<tc>, window_params = [{transform_indices = @transform_0, window_bounds = array<i64: 16, 128>}, {pipeline_mode = #tpu.pipeline_mode<synchronous>, transform_indices = @transform_1, window_bounds = array<i64: 128, 128>}, {pipeline_mode = #tpu.pipeline_mode<synchronous>, transform_indices = @transform_2, window_bounds = array<i64: 1, 128>}, {pipeline_mode = #tpu.pipeline_mode<synchronous>, transform_indices = @transform_3, window_bounds = array<i64: 128, 128>}, {pipeline_mode = #tpu.pipeline_mode<synchronous>, transform_indices = @transform_4, window_bounds = array<i64: 1, 128>}, {transform_indices = @transform_5, window_bounds = array<i64: 16, 128>}]} {
    %c0 = arith.constant 0 : index
    %c0_0 = arith.constant 0 : index
    %0 = vector.load %arg1[%c0, %c0_0] : memref<16x128xf32, #tpu.memory_space<vmem>>, vector<16x128xf32>
    %c0_1 = arith.constant 0 : index
    %c0_2 = arith.constant 0 : index
    %1 = vector.load %arg2[%c0_1, %c0_2] : memref<128x128xf32, #tpu.memory_space<vmem>>, vector<128x128xf32>
    %cst = arith.constant dense<0.000000e+00> : vector<16x128xf32>
    %2 = tpu.matmul %0, %1, %cst {dimension_numbers = #tpu.dot_dimension_numbers<[1], [0], [0], [1], [0, 0, 1, 1], [], []>} : vector<16x128xf32>, vector<128x128xf32>, vector<16x128xf32> -> vector<16x128xf32>
    %c0_3 = arith.constant 0 : index
    %c0_4 = arith.constant 0 : index
    %3 = vector.load %arg3[%c0_3, %c0_4] : memref<1x128xf32, #tpu.memory_space<vmem>>, vector<1x128xf32>
    %4 = vector.broadcast %3 : vector<1x128xf32> to vector<16x128xf32>
    %5 = arith.addf %2, %4 : vector<16x128xf32>
    %cst_5 = arith.constant 0.000000e+00 : f32
    %6 = vector.broadcast %cst_5 : f32 to vector<16x128xf32>
    %7 = arith.maximumf %5, %6 : vector<16x128xf32>
    %c0_6 = arith.constant 0 : index
    %c0_7 = arith.constant 0 : index
    %8 = vector.load %arg4[%c0_6, %c0_7] : memref<128x128xf32, #tpu.memory_space<vmem>>, vector<128x128xf32>
    %cst_8 = arith.constant dense<0.000000e+00> : vector<16x128xf32>
    %9 = tpu.matmul %7, %8, %cst_8 {dimension_numbers = #tpu.dot_dimension_numbers<[1], [0], [0], [1], [0, 0, 1, 1], [], []>} : vector<16x128xf32>, vector<128x128xf32>, vector<16x128xf32> -> vector<16x128xf32>
    %c0_9 = arith.constant 0 : index
    %c0_10 = arith.constant 0 : index
    %10 = vector.load %arg5[%c0_9, %c0_10] : memref<1x128xf32, #tpu.memory_space<vmem>>, vector<1x128xf32>
    %11 = vector.broadcast %10 : vector<1x128xf32> to vector<16x128xf32>
    %12 = arith.addf %9, %11 : vector<16x128xf32>
    %c0_11 = arith.constant 0 : index
    %c0_12 = arith.constant 0 : index
    %13 = vector.load %arg6[%c0_11, %c0_12] : memref<16x128xf32, #tpu.memory_space<vmem>>, vector<16x128xf32>
    tpu.vector_store %arg6[%c0_11, %c0_12], %12 {strides = array<i32>} : memref<16x128xf32, #tpu.memory_space<vmem>>, vector<16x128xf32>,
    return
  }
  func.func @transform_0(%arg0: i32) -> (i32, i32) {
    %c0_i32 = arith.constant 0 : i32
    %c0_i32_0 = arith.constant 0 : i32
    return %arg0, %c0_i32 : i32, i32
  }
  func.func @transform_1(%arg0: i32) -> (i32, i32) {
    %c0_i32 = arith.constant 0 : i32
    %c0_i32_0 = arith.constant 0 : i32
    %c0_i32_1 = arith.constant 0 : i32
    return %c0_i32, %c0_i32_0 : i32, i32
  }
  func.func @transform_2(%arg0: i32) -> (i32, i32) {
    %c0_i32 = arith.constant 0 : i32
    %c0_i32_0 = arith.constant 0 : i32
    %c0_i32_1 = arith.constant 0 : i32
    return %c0_i32, %c0_i32_0 : i32, i32
  }
  func.func @transform_3(%arg0: i32) -> (i32, i32) {
    %c0_i32 = arith.constant 0 : i32
    %c0_i32_0 = arith.constant 0 : i32
    %c0_i32_1 = arith.constant 0 : i32
    return %c0_i32, %c0_i32_0 : i32, i32
  }
  func.func @transform_4(%arg0: i32) -> (i32, i32) {
    %c0_i32 = arith.constant 0 : i32
    %c0_i32_0 = arith.constant 0 : i32
    %c0_i32_1 = arith.constant 0 : i32
    return %c0_i32, %c0_i32_0 : i32, i32
  }
  func.func @transform_5(%arg0: i32) -> (i32, i32) {
    %c0_i32 = arith.constant 0 : i32
    %c0_i32_0 = arith.constant 0 : i32
    return %arg0, %c0_i32 : i32, i32
  }
}

</mosaic_0001>

<llo_original>
// kernel: ffn_forward.1
$region0: #{ffn_forward.1}
  #allocation0 [shape = 'u32[]', space=smem, size = 0x4, offset = 0x4, fixed_abs, tag = 'smem constant byte address 0x4 - core index']
  #allocation1 [shape = 'u32[72,128]{1,0:T(1,128)}', space=vmem, size = 0x9000, scoped, tag = 'internal scratch']
  %s0 = inlined_call_operand.vmem [shape: f32[16,128], index: 0, kind: input, shape index: {}]
  %s1 = inlined_call_operand.hbm [shape: f32[128,128], index: 1, kind: input, shape index: {}]
  %s2 = inlined_call_operand.vmem [shape: f32[1,128], index: 2, kind: input, shape index: {}]
  %s3 = inlined_call_operand.hbm [shape: f32[128,128], index: 3, kind: input, shape index: {}]
  %s4 = inlined_call_operand.vmem [shape: f32[1,128], index: 4, kind: input, shape index: {}]
  %s5 = inlined_call_operand.vmem [shape: f32[16,128], index: 5, kind: output, shape index: {}]
  %s6 = sld [smem:[#allocation0]]
  $region38: #{ffn_forward.1} parent=0
    _
  %s8 = ssub.s32 1, %s6
  %s9 = scalar_select 0, %s8, %s6
  $region1: #{ffn_forward.1} parent=0
    #allocation2 [shape = 'u8[65536]{0}', space=vmem, size = 0x10000, scoped, tag = 'input window, operand 1, single buffered']
    #allocation3 [shape = 's32[1]{0}', space=sflag, size = 0x4, scoped, tag = 'scoped memory for ffn_forward.1']
    #allocation4 [shape = 'u8[65536]{0}', space=vmem, size = 0x10000, scoped, tag = 'input window, operand 3, single buffered']
    #allocation5 [shape = 's32[1]{0}', space=sflag, size = 0x4, scoped, tag = 'scoped memory for ffn_forward.1']
    %10 = vsyncpa [#allocation3], 0
    %11 = vsyncpa [#allocation5], 0
    // Predicated region
    $region2: #{ffn_forward.1} parent=1 // pred_check
      _
    $region3: #{ffn_forward.1} parent=1 // pred_check_branch
      %13 = sbr.rel (0) target = $region5
    $region4: #{ffn_forward.1} parent=1 // pred_region
      _
    $region5: #{ffn_forward.1} parent=1 // pred_fallthru
      _
    // Predicated region
    $region6: #{ffn_forward.1} parent=1 // pred_check
      _
    $region7: #{ffn_forward.1} parent=1 // pred_check_branch
      %15 = sbr.rel (0) target = $region9
    $region8: #{ffn_forward.1} parent=1 // pred_region
      %17 = vsyncadd [#allocation3], 0
      %s18 = sshll.u32 %s1, 4
      %s19 = int_to_ptr.hbm [resolvable:$true] %s18
      %s20 = sshll.u32 [#allocation2], 4
      %s21 = int_to_ptr.vmem [resolvable:$true] %s20
      %26 = dma.hbm_to_vmem [thread:$0]  %s19, 2048, %s21, [#allocation3], 128, 128, 8
    $region9: #{ffn_forward.1} parent=1 // pred_fallthru
      _
    // Predicated region
    $region10: #{ffn_forward.1} parent=1 // pred_check
      _
    $region11: #{ffn_forward.1} parent=1 // pred_check_branch
      %28 = sbr.rel (0) target = $region13
    $region12: #{ffn_forward.1} parent=1 // pred_region
      _
    $region13: #{ffn_forward.1} parent=1 // pred_fallthru
      _
    // Predicated region
    $region14: #{ffn_forward.1} parent=1 // pred_check
      _
    $region15: #{ffn_forward.1} parent=1 // pred_check_branch
      %30 = sbr.rel (0) target = $region17
    $region16: #{ffn_forward.1} parent=1 // pred_region
      %32 = vsyncadd [#allocation5], 0
      %s33 = sshll.u32 %s3, 4
      %s34 = int_to_ptr.hbm [resolvable:$true] %s33
      %s35 = sshll.u32 [#allocation4], 4
      %s36 = int_to_ptr.vmem [resolvable:$true] %s35
      %41 = dma.hbm_to_vmem [thread:$0]  %s34, 2048, %s36, [#allocation5], 128, 128, 8
    $region17: #{ffn_forward.1} parent=1 // pred_fallthru
      _
    // Predicated region
    $region18: #{ffn_forward.1} parent=1 // pred_check
      _
    $region19: #{ffn_forward.1} parent=1 // pred_check_branch
      %43 = sbr.rel (0) target = $region21
    $region20: #{ffn_forward.1} parent=1 // pred_region
      _
    $region21: #{ffn_forward.1} parent=1 // pred_fallthru
      _
    // Predicated region
    $region22: #{ffn_forward.1} parent=1 // pred_check
      _
    $region23: #{ffn_forward.1} parent=1 // pred_check_branch
      %45 = sbr.rel (0) target = $region25
    $region24: #{ffn_forward.1} parent=1 // pred_region
      %47 = dma.done [#allocation3], 2048
    $region25: #{ffn_forward.1} parent=1 // pred_fallthru
      _
    // Predicated region
    $region26: #{ffn_forward.1} parent=1 // pred_check
      _
    $region27: #{ffn_forward.1} parent=1 // pred_check_branch
      %49 = sbr.rel (0) target = $region29
    $region28: #{ffn_forward.1} parent=1 // pred_region
      %51 = dma.done [#allocation5], 2048
    $region29: #{ffn_forward.1} parent=1 // pred_fallthru
      _
    %v52 = vld [vmem:[%s0] sm:$0xff]
    %v53 = vld [vmem:[%s0 + $0x8] sm:$0xff]
    %v54 = vld [vmem:[#allocation2] sm:$0xff]
    %v55 = vld [vmem:[#allocation2 + $0x8] sm:$0xff]
    %v56 = vld [vmem:[#allocation2 + $0x10] sm:$0xff]
    %v57 = vld [vmem:[#allocation2 + $0x18] sm:$0xff]
    %v58 = vld [vmem:[#allocation2 + $0x20] sm:$0xff]
    %v59 = vld [vmem:[#allocation2 + $0x28] sm:$0xff]
    %v60 = vld [vmem:[#allocation2 + $0x30] sm:$0xff]
    %v61 = vld [vmem:[#allocation2 + $0x38] sm:$0xff]
    %v62 = vld [vmem:[#allocation2 + $0x40] sm:$0xff]
    %v63 = vld [vmem:[#allocation2 + $0x48] sm:$0xff]
    %v64 = vld [vmem:[#allocation2 + $0x50] sm:$0xff]
    %v65 = vld [vmem:[#allocation2 + $0x58] sm:$0xff]
    %v66 = vld [vmem:[#allocation2 + $0x60] sm:$0xff]
    %v67 = vld [vmem:[#allocation2 + $0x68] sm:$0xff]
    %v68 = vld [vmem:[#allocation2 + $0x70] sm:$0xff]
    %v69 = vld [vmem:[#allocation2 + $0x78] sm:$0xff]
    %v70 = vld [vmem:[%s2] sm:$0x1]
    %v72 = vperm.slane %v70, 0
    %74 = vmatpush.msra.mxu0 %v69
    %75 = vmatpush.msra.mxu0 %v68
    %76 = vmatpush.msra.mxu0 %v67
    %77 = vmatpush.msra.mxu0 %v66
    %78 = vmatpush.msra.mxu0 %v65
    %79 = vmatpush.msra.mxu0 %v64
    %80 = vmatpush.msra.mxu0 %v63
    %81 = vmatpush.msra.mxu0 %v62
    %82 = vmatpush.msra.mxu0 %v61
    %83 = vmatpush.msra.mxu0 %v60
    %84 = vmatpush.msra.mxu0 %v59
    %85 = vmatpush.msra.mxu0 %v58
    %86 = vmatpush.msra.mxu0 %v57
    %87 = vmatpush.msra.mxu0 %v56
    %88 = vmatpush.msra.mxu0 %v55
    %89 = vmatpush.msra.mxu0 %v54
    %90 = vmatmul.f32.gmra.mxu0 %v52
    %v91 = vpop.f32.mrf.mxu0
    %v92 = vadd.f32 %v72, %v91
    %93 = vmatmul.f32.gmra.mxu0 %v53
    %v94 = vpop.f32.mrf.mxu0
    %v95 = vadd.f32 %v72, %v94
    %96 = vdwg.mxu0
    %v97 = vmax.f32 %v92, 0.0
    %v98 = vmax.f32 %v95, 0.0
    %v99 = vld [vmem:[#allocation4] sm:$0xff]
    %v100 = vld [vmem:[#allocation4 + $0x8] sm:$0xff]
    %v101 = vld [vmem:[#allocation4 + $0x10] sm:$0xff]
    %v102 = vld [vmem:[#allocation4 + $0x18] sm:$0xff]
    %v103 = vld [vmem:[#allocation4 + $0x20] sm:$0xff]
    %v104 = vld [vmem:[#allocation4 + $0x28] sm:$0xff]
    %v105 = vld [vmem:[#allocation4 + $0x30] sm:$0xff]
    %v106 = vld [vmem:[#allocation4 + $0x38] sm:$0xff]
    %v107 = vld [vmem:[#allocation4 + $0x40] sm:$0xff]
    %v108 = vld [vmem:[#allocation4 + $0x48] sm:$0xff]
    %v109 = vld [vmem:[#allocation4 + $0x50] sm:$0xff]
    %v110 = vld [vmem:[#allocation4 + $0x58] sm:$0xff]
    %v111 = vld [vmem:[#allocation4 + $0x60] sm:$0xff]
    %v112 = vld [vmem:[#allocation4 + $0x68] sm:$0xff]
    %v113 = vld [vmem:[#allocation4 + $0x70] sm:$0xff]
    %v114 = vld [vmem:[#allocation4 + $0x78] sm:$0xff]
    %v115 = vld [vmem:[%s4] sm:$0x1]
    %v117 = vperm.slane %v115, 0
    %119 = vmatpush.msra.mxu0 %v114
    %120 = vmatpush.msra.mxu0 %v113
    %121 = vmatpush.msra.mxu0 %v112
    %122 = vmatpush.msra.mxu0 %v111
    %123 = vmatpush.msra.mxu0 %v110
    %124 = vmatpush.msra.mxu0 %v109
    %125 = vmatpush.msra.mxu0 %v108
    %126 = vmatpush.msra.mxu0 %v107
    %127 = vmatpush.msra.mxu0 %v106
    %128 = vmatpush.msra.mxu0 %v105
    %129 = vmatpush.msra.mxu0 %v104
    %130 = vmatpush.msra.mxu0 %v103
    %131 = vmatpush.msra.mxu0 %v102
    %132 = vmatpush.msra.mxu0 %v101
    %133 = vmatpush.msra.mxu0 %v100
    %134 = vmatpush.msra.mxu0 %v99
    %135 = vmatmul.f32.gmra.mxu0 %v97
    %v136 = vpop.f32.mrf.mxu0
    %v137 = vadd.f32 %v117, %v136
    %138 = vmatmul.f32.gmra.mxu0 %v98
    %v139 = vpop.f32.mrf.mxu0
    %v140 = vadd.f32 %v117, %v139
    %141 = vdwg.mxu0
    %142 = vst [vmem:[%s5] sm:$0xff] %v137
    %143 = vst [vmem:[%s5 + $0x8] sm:$0xff] %v140
    // Predicated region
    $region30: #{ffn_forward.1} parent=1 // pred_check
      _
    $region31: #{ffn_forward.1} parent=1 // pred_check_branch
      %145 = sbr.rel (0) target = $region33
    $region32: #{ffn_forward.1} parent=1 // pred_region
      _
    $region33: #{ffn_forward.1} parent=1 // pred_fallthru
      _
    // Predicated region
    $region34: #{ffn_forward.1} parent=1 // pred_check
      _
    $region35: #{ffn_forward.1} parent=1 // pred_check_branch
      %147 = sbr.rel (0) target = $region37
    $region36: #{ffn_forward.1} parent=1 // pred_region
      _
    $region37: #{ffn_forward.1} parent=1 // pred_fallthru
      _
    %148 = vsyncpa [#allocation3], 1
    %149 = vsyncpa [#allocation5], 1

</llo_original>
